<compile_context>
chip_gen: v7x
topology: tpu7x:2x2x1
jax: 0.10.0
libtpu: 0.0.40
codegen_flags: <defaults>
</compile_context>

<pallas_src>
import functools

import jax
import jax.numpy as jnp
from jax.experimental import pallas as pl
from jax.experimental.pallas import tpu as pltpu


def _rotate_kernel(h_ref, r_ref, t_ref, score_ref, *, half):
    h = h_ref[...].astype(jnp.float32)
    r = r_ref[...].astype(jnp.float32)
    t = t_ref[...].astype(jnp.float32)

    # In-kernel real/imag split (static slices; lane-aligned when half % 128 == 0).
    h_re, h_im = h[:, :half], h[:, half:]
    r_re, r_im = r[:, :half], r[:, half:]
    t_re, t_im = t[:, :half], t[:, half:]

    # Complex rotation and target diff folded together (fewer live f32 temps):
    #   d_re = Re(h * r) - t_re,  d_im = Im(h * r) - t_im
    d_re = h_re * r_re - h_im * r_im - t_re
    d_im = h_re * r_im + h_im * r_re - t_im

    # ||[d_re, d_im]||_2 per batch row, accumulated in f32.
    sq_sum = jnp.sum(d_re * d_re + d_im * d_im, axis=-1, keepdims=True)
    # Lane-dense store: [block_b, 1] -> [1, block_b]  (XLU transpose is free-ish).
    score_ref[...] = jnp.transpose(jnp.sqrt(sq_sum))


def _round_up(x, m):
    return -(-x // m) * m


def _vmem_budgets():
    """(tile_budget_bytes, vmem_limit_bytes) derived from the actual chip."""
    try:
        cap = int(getattr(pltpu.get_tpu_info(), "vmem_capacity_bytes"))
    except Exception:
        cap = 64 * 1024 * 1024  # conservative default = v7x per-TC VMEM
    tile_budget = int(cap * 0.60)                       # live tile data
    vmem_limit = min(int(cap * 0.85), 110 * 1024 * 1024)  # leave Mosaic headroom
    return tile_budget, vmem_limit


def _choose_block_b(B, D, itemsize, tile_budget):
    """Pick the batch tile: as large as VMEM allows, but keep >= ~8 grid steps."""
    # Sublane packing per dtype width (f32: 8, bf16: 16, int8/fp8: 32).
    sublane = {4: 8, 2: 16, 1: 32}.get(itemsize, 8)
    lane_d = _round_up(D, 128)  # lane-padded row width in elements
    # Live VMEM per batch row:
    #   3 inputs x 2 pipeline buffers at input dtype (lane padded)
    # + ~8 full-width f32 temporaries materialized by the kernel body.
    bytes_per_row = 3 * 2 * lane_d * itemsize + 8 * lane_d * 4
    cand = max(sublane, tile_budget // bytes_per_row)
    # Prefer >= ~8 grid steps (hide pipeline fill/drain, keep both v7x TCs busy),
    # but never shrink below one sublane group for tiny batches.
    per_step = pl.cdiv(B, 8)
    cand = min(cand, max(sublane, per_step))
    cand = max(sublane, (cand // sublane) * sublane)
    return int(cand)


def rotate_score(h, r, t, *, block_b=None):
    """h, r, t: [B, D] floats with D even. Returns score: [B] float32."""
    B, D = h.shape
    assert D % 2 == 0, "Embedding dimension must be even for RotatE."
    half = D // 2
    itemsize = jnp.dtype(h.dtype).itemsize

    tile_budget, vmem_limit = _vmem_budgets()
    if block_b is None:
        block_b = _choose_block_b(B, D, itemsize, tile_budget)

    # Ragged last block is fine: garbage rows read past B produce garbage
    # scores that are dropped by the final [:B] slice (no jnp.pad HBM copies).
    num_blocks = pl.cdiv(B, block_b)

    in_spec = pl.BlockSpec((block_b, D), lambda i: (i, 0))
    out_spec = pl.BlockSpec((1, block_b), lambda i: (i, 0))

    cost = pl.CostEstimate(
        flops=6 * B * D,
        transcendentals=B,
        bytes_accessed=3 * B * D * itemsize + B * 4,
    )

    out = pl.pallas_call(
        functools.partial(_rotate_kernel, half=half),
        out_shape=jax.ShapeDtypeStruct((num_blocks, block_b), jnp.float32),
        grid_spec=pltpu.PrefetchScalarGridSpec(
            num_scalar_prefetch=0,
            grid=(num_blocks,),
            in_specs=[in_spec, in_spec, in_spec],
            out_specs=out_spec,
        ),
        compiler_params=pltpu.CompilerParams(
            dimension_semantics=("parallel",),
            vmem_limit_bytes=int(vmem_limit),
        ),
        cost_estimate=cost,
    )(h, r, t)

    return out.reshape(num_blocks * block_b)[:B]


def rotate_score_ref(h, r, t):
    """Pure-JAX reference mirroring the PyTorch forward."""
    D = h.shape[-1]
    half = D // 2
    h_real, h_imag = h[..., :half], h[..., half:]
    r_real, r_imag = r[..., :half], r[..., half:]
    t_real, t_imag = t[..., :half], t[..., half:]
    t_pred_real = h_real * r_real - h_imag * r_imag
    t_pred_imag = h_real * r_imag + h_imag * r_real
    real_diff = t_pred_real - t_real
    imag_diff = t_pred_imag - t_imag
    diff = jnp.concatenate([real_diff, imag_diff], axis=-1)
    return jnp.sqrt(jnp.sum(diff * diff, axis=-1))


if __name__ == "__main__":
    key = jax.random.PRNGKey(0)

    # Case 1: small shapes (batch=8, emb_dim=32), single grid step.
    B, D = 8, 32
    kh, kr, kt = jax.random.split(key, 3)
    h = jax.random.normal(kh, (B, D), dtype=jnp.float32)
    r = jax.random.normal(kr, (B, D), dtype=jnp.float32)
    t = jax.random.normal(kt, (B, D), dtype=jnp.float32)
    score = jax.block_until_ready(rotate_score(h, r, t))
    expected = rotate_score_ref(h, r, t)
    assert score.shape == (B,)
    assert jnp.allclose(score, expected, atol=1e-5, rtol=1e-5), (
        "mismatch vs reference (case 1)")

    # Case 2: ragged batch (exercises the un-padded ragged last block + 2-step grid).
    B2, D2 = 13, 32
    kh2, kr2, kt2 = jax.random.split(jax.random.PRNGKey(1), 3)
    h2 = jax.random.normal(kh2, (B2, D2), dtype=jnp.float32)
    r2 = jax.random.normal(kr2, (B2, D2), dtype=jnp.float32)
    t2 = jax.random.normal(kt2, (B2, D2), dtype=jnp.float32)
    score2 = jax.block_until_ready(rotate_score(h2, r2, t2))
    expected2 = rotate_score_ref(h2, r2, t2)
    assert score2.shape == (B2,)
    assert jnp.allclose(score2, expected2, atol=1e-5, rtol=1e-5), (
        "mismatch vs reference (case 2)")

    # Case 3: module-default emb_dim=256 (lane-aligned half=128), bf16 inputs.
    B3, D3 = 16, 256
    kh3, kr3, kt3 = jax.random.split(jax.random.PRNGKey(2), 3)
    h3 = jax.random.normal(kh3, (B3, D3), dtype=jnp.bfloat16)
    r3 = jax.random.normal(kr3, (B3, D3), dtype=jnp.bfloat16)
    t3 = jax.random.normal(kt3, (B3, D3), dtype=jnp.bfloat16)
    score3 = jax.block_until_ready(rotate_score(h3, r3, t3))
    expected3 = rotate_score_ref(h3.astype(jnp.float32),
                                 r3.astype(jnp.float32),
                                 t3.astype(jnp.float32))
    assert score3.shape == (B3,)
    assert jnp.allclose(score3, expected3, atol=1e-3, rtol=1e-3), (
        "mismatch vs reference (case 3)")

    print("KERNEL_OK")
</pallas_src>

<mosaic_0001>
module attributes {stable_mosaic.version = 11 : i64} {
  func.func @_rotate_kernel(%arg0: i32, %arg1: memref<8x32xf32, #tpu.memory_space<vmem>>, %arg2: memref<8x32xf32, #tpu.memory_space<vmem>>, %arg3: memref<8x32xf32, #tpu.memory_space<vmem>>, %arg4: memref<1x8xf32, #tpu.memory_space<vmem>>) attributes {dimension_semantics = [#tpu.dimension_semantics<parallel>], iteration_bounds = array<i64: 1>, scalar_prefetch = 0 : i64, scratch_operands = 0 : i64, tpu.core_type = #tpu.core_type<tc>, window_params = [{transform_indices = @transform_0, window_bounds = array<i64: 8, 32>}, {transform_indices = @transform_1, window_bounds = array<i64: 8, 32>}, {transform_indices = @transform_2, window_bounds = array<i64: 8, 32>}, {transform_indices = @transform_3, window_bounds = array<i64: 1, 8>}]} {
    %c0 = arith.constant 0 : index
    %c0_0 = arith.constant 0 : index
    %0 = vector.load %arg1[%c0, %c0_0] : memref<8x32xf32, #tpu.memory_space<vmem>>, vector<8x32xf32>
    %c0_1 = arith.constant 0 : index
    %c0_2 = arith.constant 0 : index
    %1 = vector.load %arg2[%c0_1, %c0_2] : memref<8x32xf32, #tpu.memory_space<vmem>>, vector<8x32xf32>
    %c0_3 = arith.constant 0 : index
    %c0_4 = arith.constant 0 : index
    %2 = vector.load %arg3[%c0_3, %c0_4] : memref<8x32xf32, #tpu.memory_space<vmem>>, vector<8x32xf32>
    %3 = vector.extract_strided_slice %0 {offsets = [0, 0], sizes = [8, 16], strides = [1, 1]} : vector<8x32xf32> to vector<8x16xf32>
    %4 = vector.extract_strided_slice %0 {offsets = [0, 16], sizes = [8, 16], strides = [1, 1]} : vector<8x32xf32> to vector<8x16xf32>
    %5 = vector.extract_strided_slice %1 {offsets = [0, 0], sizes = [8, 16], strides = [1, 1]} : vector<8x32xf32> to vector<8x16xf32>
    %6 = vector.extract_strided_slice %1 {offsets = [0, 16], sizes = [8, 16], strides = [1, 1]} : vector<8x32xf32> to vector<8x16xf32>
    %7 = vector.extract_strided_slice %2 {offsets = [0, 0], sizes = [8, 16], strides = [1, 1]} : vector<8x32xf32> to vector<8x16xf32>
    %8 = vector.extract_strided_slice %2 {offsets = [0, 16], sizes = [8, 16], strides = [1, 1]} : vector<8x32xf32> to vector<8x16xf32>
    %9 = arith.mulf %3, %5 : vector<8x16xf32>
    %10 = arith.mulf %4, %6 : vector<8x16xf32>
    %11 = arith.subf %9, %10 : vector<8x16xf32>
    %12 = arith.subf %11, %7 : vector<8x16xf32>
    %13 = arith.mulf %3, %6 : vector<8x16xf32>
    %14 = arith.mulf %4, %5 : vector<8x16xf32>
    %15 = arith.addf %13, %14 : vector<8x16xf32>
    %16 = arith.subf %15, %8 : vector<8x16xf32>
    %17 = arith.mulf %12, %12 : vector<8x16xf32>
    %18 = arith.mulf %16, %16 : vector<8x16xf32>
    %19 = arith.addf %17, %18 : vector<8x16xf32>
    %cst = arith.constant dense<0.000000e+00> : vector<8xf32>
    %20 = vector.multi_reduction <add>, %19, %cst [1] : vector<8x16xf32> to vector<8xf32>
    %21 = vector.shape_cast %20 : vector<8xf32> to vector<8x1xf32>
    %22 = math.sqrt %21 : vector<8x1xf32>
    %23 = tpu.transpose %22, [1, 0] : vector<8x1xf32> -> vector<1x8xf32>
    %c0_5 = arith.constant 0 : index
    %c0_6 = arith.constant 0 : index
    %24 = vector.load %arg4[%c0_5, %c0_6] : memref<1x8xf32, #tpu.memory_space<vmem>>, vector<1x8xf32>
    tpu.vector_store %arg4[%c0_5, %c0_6], %23 {strides = array<i32>} : memref<1x8xf32, #tpu.memory_space<vmem>>, vector<1x8xf32>,
    return
  }
  func.func @transform_0(%arg0: i32) -> (i32, i32) {
    %c0_i32 = arith.constant 0 : i32
    %c0_i32_0 = arith.constant 0 : i32
    return %arg0, %c0_i32 : i32, i32
  }
  func.func @transform_1(%arg0: i32) -> (i32, i32) {
    %c0_i32 = arith.constant 0 : i32
    %c0_i32_0 = arith.constant 0 : i32
    return %arg0, %c0_i32 : i32, i32
  }
  func.func @transform_2(%arg0: i32) -> (i32, i32) {
    %c0_i32 = arith.constant 0 : i32
    %c0_i32_0 = arith.constant 0 : i32
    return %arg0, %c0_i32 : i32, i32
  }
  func.func @transform_3(%arg0: i32) -> (i32, i32) {
    %c0_i32 = arith.constant 0 : i32
    %c0_i32_0 = arith.constant 0 : i32
    return %arg0, %c0_i32 : i32, i32
  }
}

</mosaic_0001>

<llo_original>
// kernel: tpu_custom_call.1
$region0: #{tpu_custom_call.1}
  #allocation0 [shape = 'u32[]', space=smem, size = 0x4, offset = 0x4, fixed_abs, tag = 'smem constant byte address 0x4 - core index']
  #allocation1 [shape = 'u32[144,128]{1,0:T(1,128)}', space=vmem, size = 0x12000, scoped, tag = 'internal scratch']
  %s0 = inlined_call_operand.hbm [shape: f32[8,32], index: 0, kind: input, shape index: {}]
  %s1 = inlined_call_operand.hbm [shape: f32[8,32], index: 1, kind: input, shape index: {}]
  %s2 = inlined_call_operand.hbm [shape: f32[8,32], index: 2, kind: input, shape index: {}]
  %s3 = inlined_call_operand.hbm [shape: f32[1,8], index: 3, kind: output, shape index: {}]
  %s4 = sld [smem:[#allocation0]]
  $region34: #{tpu_custom_call.1} parent=0
    _
  %s6 = ssub.s32 1, %s4
  %s7 = scalar_select 0, %s6, %s4
  $region1: #{tpu_custom_call.1} parent=0
    #allocation2 [shape = 'u8[4096]{0}', space=vmem, size = 0x1000, scoped, tag = 'input window, operand 0, single buffered']
    #allocation3 [shape = 's32[1]{0}', space=sflag, size = 0x4, scoped, tag = 'scoped memory for tpu_custom_call.1']
    #allocation4 [shape = 's32[1]{0}', space=sflag, size = 0x4, scoped, tag = 'scoped memory for tpu_custom_call.1']
    #allocation5 [shape = 'u8[4096]{0}', space=vmem, size = 0x1000, scoped, tag = 'input window, operand 1, single buffered']
    #allocation6 [shape = 's32[1]{0}', space=sflag, size = 0x4, scoped, tag = 'scoped memory for tpu_custom_call.1']
    #allocation7 [shape = 'u8[4096]{0}', space=vmem, size = 0x1000, scoped, tag = 'input window, operand 2, single buffered']
    #allocation8 [shape = 'u8[512]{0}', space=vmem, size = 0x400, scoped, tag = 'output window, operand 0, single buffered']
    %8 = vsyncpa [#allocation3], 0
    %9 = vsyncpa [#allocation6], 0
    %10 = vsyncpa [#allocation4], 0
    // Predicated region
    $region2: #{tpu_custom_call.1} parent=1 // pred_check
      _
    $region3: #{tpu_custom_call.1} parent=1 // pred_check_branch
      %12 = sbr.rel (0) target = $region5
    $region4: #{tpu_custom_call.1} parent=1 // pred_region
      %s14 = ssub.s32 128, 128
      %15 = vsyncadd [#allocation3], %s14
      %s17 = sshll.u32 [#allocation2], 4
      %s18 = int_to_ptr.vmem [resolvable:$true] %s17
      %20 = dma.hbm_to_vmem [thread:$0]  %s0, 128, %s18, [#allocation3]
    $region5: #{tpu_custom_call.1} parent=1 // pred_fallthru
      _
    // Predicated region
    $region6: #{tpu_custom_call.1} parent=1 // pred_check
      _
    $region7: #{tpu_custom_call.1} parent=1 // pred_check_branch
      %22 = sbr.rel (0) target = $region9
    $region8: #{tpu_custom_call.1} parent=1 // pred_region
      %s24 = ssub.s32 128, 128
      %25 = vsyncadd [#allocation6], %s24
      %s27 = sshll.u32 [#allocation5], 4
      %s28 = int_to_ptr.vmem [resolvable:$true] %s27
      %30 = dma.hbm_to_vmem [thread:$0]  %s1, 128, %s28, [#allocation6]
    $region9: #{tpu_custom_call.1} parent=1 // pred_fallthru
      _
    // Predicated region
    $region10: #{tpu_custom_call.1} parent=1 // pred_check
      _
    $region11: #{tpu_custom_call.1} parent=1 // pred_check_branch
      %32 = sbr.rel (0) target = $region13
    $region12: #{tpu_custom_call.1} parent=1 // pred_region
      %s34 = ssub.s32 128, 128
      %35 = vsyncadd [#allocation6], %s34
      %s37 = sshll.u32 [#allocation7], 4
      %s38 = int_to_ptr.vmem [resolvable:$true] %s37
      %40 = dma.hbm_to_vmem [thread:$0]  %s2, 128, %s38, [#allocation6]
    $region13: #{tpu_custom_call.1} parent=1 // pred_fallthru
      _
    // Predicated region
    $region14: #{tpu_custom_call.1} parent=1 // pred_check
      _
    $region15: #{tpu_custom_call.1} parent=1 // pred_check_branch
      %42 = sbr.rel (0) target = $region17
    $region16: #{tpu_custom_call.1} parent=1 // pred_region
      %43 = dma.done [#allocation3], 128
    $region17: #{tpu_custom_call.1} parent=1 // pred_fallthru
      _
    // Predicated region
    $region18: #{tpu_custom_call.1} parent=1 // pred_check
      _
    $region19: #{tpu_custom_call.1} parent=1 // pred_check_branch
      %45 = sbr.rel (0) target = $region21
    $region20: #{tpu_custom_call.1} parent=1 // pred_region
      %46 = dma.done [#allocation6], 128
    $region21: #{tpu_custom_call.1} parent=1 // pred_fallthru
      _
    // Predicated region
    $region22: #{tpu_custom_call.1} parent=1 // pred_check
      _
    $region23: #{tpu_custom_call.1} parent=1 // pred_check_branch
      %48 = sbr.rel (0) target = $region25
    $region24: #{tpu_custom_call.1} parent=1 // pred_region
      %49 = dma.done [#allocation6], 128
    $region25: #{tpu_custom_call.1} parent=1 // pred_fallthru
      _
    %v50 = vld [vmem:[#allocation2] sm:$0xff]
    %v51 = vld [vmem:[#allocation5] sm:$0xff]
    %v52 = vld [vmem:[#allocation7] sm:$0xff]
    %v53 = vmul.f32 %v50, %v51
    %55 = vrot.lane.b32.xlu0 %v53, 112
    %v56 = vpop.permute.xlu0 %55
    %v58 = vsub.f32 %v53, %v56
    %v59 = vsub.f32 %v58, %v52
    %61 = vrot.lane.b32.xlu0 %v51, 112
    %v62 = vpop.permute.xlu0 %61
    %v64 = vmul.f32 %v50, %v62
    %65 = vrot.lane.b32.xlu0 %v51, 16
    %v66 = vpop.permute.xlu0 %65
    %v68 = vmul.f32 %v50, %v66
    %70 = vrot.lane.b32.xlu0 %v68, 112
    %v71 = vpop.permute.xlu0 %70
    %v73 = vadd.f32 %v64, %v71
    %75 = vrot.lane.b32.xlu0 %v52, 112
    %v76 = vpop.permute.xlu0 %75
    %v78 = vsub.f32 %v73, %v76
    %v79 = vmul.f32 %v59, %v59
    %v80 = vmul.f32 %v78, %v78
    %v81 = vadd.f32 %v79, %v80
    %vm82 = vcmask 130048
    %v83 = vsel %vm82, %v81, 0.0
    %84 = vadd.xlane.f32.xlu0 %v83
    %v85 = vpop.xlane.xlu0 %84
    %v86 = vrsqrt.pop %v85
    %v87 = vmul.f32 %v85, %v86
    %vm88 = vcmp.eq.f32.partialorder %v85, inf
    %v89 = vsel %vm88, %v85, %v87
    %vm90 = vcmp.eq.f32.partialorder %v85, 0.0
    %v91 = vand.u32 %v85, 2147483648
    %v92 = vsel %vm90, %v91, %v89
    %93 = vxpose.xlu0.b32.start [1/16] %v92, 128
    %94 = vxpose.xlu0.b32.cont [2/16] 0.0, 128
    %95 = vxpose.xlu0.b32.cont [3/16] 0.0, 128
    %96 = vxpose.xlu0.b32.cont [4/16] 0.0, 128
    %97 = vxpose.xlu0.b32.cont [5/16] 0.0, 128
    %98 = vxpose.xlu0.b32.cont [6/16] 0.0, 128
    %99 = vxpose.xlu0.b32.cont [7/16] 0.0, 128
    %100 = vxpose.xlu0.b32.cont [8/16] 0.0, 128
    %101 = vxpose.xlu0.b32.cont [9/16] 0.0, 128
    %102 = vxpose.xlu0.b32.cont [10/16] 0.0, 128
    %103 = vxpose.xlu0.b32.cont [11/16] 0.0, 128
    %104 = vxpose.xlu0.b32.cont [12/16] 0.0, 128
    %105 = vxpose.xlu0.b32.cont [13/16] 0.0, 128
    %106 = vxpose.xlu0.b32.cont [14/16] 0.0, 128
    %107 = vxpose.xlu0.b32.cont [15/16] 0.0, 128
    %108 = vxpose.xlu0.b32.end [16/16] 0.0, 128
    %v109 = vpop.trf.xlu0
    %v110 = vpop.trf.xlu0
    %v111 = vpop.trf.xlu0
    %v112 = vpop.trf.xlu0
    %v113 = vpop.trf.xlu0
    %v114 = vpop.trf.xlu0
    %v115 = vpop.trf.xlu0
    %v116 = vpop.trf.xlu0
    %v117 = vpop.trf.xlu0
    %v118 = vpop.trf.xlu0
    %v119 = vpop.trf.xlu0
    %v120 = vpop.trf.xlu0
    %v121 = vpop.trf.xlu0
    %v122 = vpop.trf.xlu0
    %v123 = vpop.trf.xlu0
    %v124 = vpop.trf.xlu0
    %vm125 = vcmask 57344
    %126 = vst.msk [vmem:[#allocation8] sm:$0x1] %vm125, %v109
    // Predicated region
    $region26: #{tpu_custom_call.1} parent=1 // pred_check
      _
    $region27: #{tpu_custom_call.1} parent=1 // pred_check_branch
      %128 = sbr.rel (0) target = $region29
    $region28: #{tpu_custom_call.1} parent=1 // pred_region
      %s130 = ssub.s32 16, 16
      %131 = vsyncadd [#allocation4], %s130
      %s133 = sshll.u32 [#allocation8], 4
      %s134 = int_to_ptr.vmem [resolvable:$true] %s133
      %136 = dma.vmem_to_hbm [thread:$0]  %s134, 16, %s3, [#allocation4]
    $region29: #{tpu_custom_call.1} parent=1 // pred_fallthru
      _
    // Predicated region
    $region30: #{tpu_custom_call.1} parent=1 // pred_check
      _
    $region31: #{tpu_custom_call.1} parent=1 // pred_check_branch
      %138 = sbr.rel (0) target = $region33
    $region32: #{tpu_custom_call.1} parent=1 // pred_region
      %139 = dma.done [#allocation4], 16
    $region33: #{tpu_custom_call.1} parent=1 // pred_fallthru
      _
    %140 = vsyncpa [#allocation3], 1
    %141 = vsyncpa [#allocation6], 1
    %142 = vsyncpa [#allocation4], 1

</llo_original>
